<compile_context>
chip_gen: v6e
topology: v6e:2x2x1
jax: 0.10.0
libtpu: 0.0.40
codegen_flags: <defaults>
</compile_context>

<pallas_src>
import functools

import jax
import jax.numpy as jnp
from jax.experimental import pallas as pl
from jax.experimental.pallas import tpu as pltpu


def _round_up(x, m):
    return (x + m - 1) // m * m


def _cdiv(a, b):
    return -(-a // b)


def _vmem_cap_bytes():
    """Generation-aware usable-VMEM budget (v5e/v6e ~112 MiB, v7x ~48 MiB)."""
    cap = 64 * 1024 * 1024                     # conservative fallback
    try:
        hw = int(pltpu.get_tpu_info().vmem_capacity_bytes)
        if hw > 0:
            cap = hw
    except Exception:
        pass
    return max(32 * 1024 * 1024, cap - 16 * 1024 * 1024)   # leave headroom


def _residual_fullk_kernel(x_ref, w_ref, b_ref, *rest, has_res_input, cast):
    """One (tile_rows, tile_cols) output tile of (x @ W + b) + x.

    x_ref is the full-K row block, resident across the column sweep.  When the
    whole feature dim is a single column tile (full-W residency, the common
    case) the residual comes straight from x_ref, so x is streamed from HBM
    exactly once; otherwise a column-tiled residual input is used.
    """
    if has_res_input:
        x_res_ref, o_ref, *scratch = rest
    else:
        o_ref, *scratch = rest
        x_res_ref = x_ref                      # single column tile == row block

    if cast:
        # bf16 (etc.) MXU path: cast the row block once per row tile into a
        # VMEM scratch and reuse it across the whole column sweep.
        x_mm_ref = scratch[0]

        @pl.when(pl.program_id(1) == 0)
        def _():
            x_mm_ref[...] = x_ref[...].astype(x_mm_ref.dtype)

        lhs = x_mm_ref[...]
    else:
        lhs = x_ref[...]

    y = jnp.dot(lhs, w_ref[...], preferred_element_type=jnp.float32)
    y = y + b_ref[...].astype(jnp.float32)      # (1, tile_cols) bias broadcast
    y = y + x_res_ref[...].astype(jnp.float32)  # exact residual, original dtype
    o_ref[...] = y.astype(o_ref.dtype)


def _residual_ktiled_kernel(x_ref, w_ref, b_ref, x_res_ref, o_ref, acc_ref):
    """K-tiled path: f32 VMEM accumulator across k, finalize at the last k."""
    k = pl.program_id(2)

    @pl.when(k == 0)
    def _():
        acc_ref[...] = jnp.zeros_like(acc_ref)

    acc_ref[...] += jnp.dot(x_ref[...], w_ref[...],
                            preferred_element_type=jnp.float32)

    @pl.when(k == pl.num_programs(2) - 1)
    def _():
        y = acc_ref[...] + b_ref[...].astype(jnp.float32)
        y = y + x_res_ref[...].astype(jnp.float32)
        o_ref[...] = y.astype(o_ref.dtype)


def residual_linear(x, w, b, *, tile_rows=None, tile_cols=None,
                    matmul_dtype=None, tile_k=None):
    """out = fn(x) + x  with fn(x) = x @ w + b.

    x: (N, D)   w: (D, D)   b: (D,)
    matmul_dtype : e.g. jnp.bfloat16 for the fast MXU path (accumulation, bias
      and residual stay exact f32).  Default keeps the input dtype (exact).
    tile_k : force the K-tiled accumulator path; auto-enabled for very large D
      when the full-K row block no longer fits the VMEM budget.
    """
    N, D = x.shape
    assert w.shape == (D, D) and b.shape == (D,)
    out_dtype = x.dtype
    x_dtype = jnp.dtype(x.dtype)
    x_it = x_dtype.itemsize
    out_it = jnp.dtype(out_dtype).itemsize

    if matmul_dtype is None:
        matmul_dtype = x_dtype          # exact path; pass bf16 for the fast path
    matmul_dtype = jnp.dtype(matmul_dtype)
    mm_it = matmul_dtype.itemsize
    cast = matmul_dtype != x_dtype

    D_pad = _round_up(D, 128)           # lane-dense feature dim (unmasked vst)
    vmem_cap = _vmem_cap_bytes()

    # ---- column tile: full-W residency when W fits the budget ---------------
    if tile_cols is None:
        w_bytes = D_pad * D_pad * mm_it
        if 2 * w_bytes <= vmem_cap // 3:
            tile_cols = D_pad                       # W DMA'd once, stays resident
        else:
            tile_cols = 256 if D_pad % 256 == 0 else 128
    tile_cols = min(tile_cols, D_pad)
    if tile_cols % 128 != 0 or D_pad % tile_cols != 0:
        tile_cols = 128                             # friendly fallback

    # ---- row tile: large (fewer W re-streams), balanced, >=2 tiles (2 TCs) --
    sub = max(8, 32 // min(x_it, mm_it))            # sublane quantum
    if tile_rows is None:
        tile_rows = 512
    tile_rows = max(sub, min(_round_up(tile_rows, sub), _round_up(N, sub)))
    n_row = _cdiv(N, tile_rows)
    tile_rows = _round_up(_cdiv(N, n_row), sub)     # balance the last tile
    if n_row == 1 and tile_rows >= 2 * sub:
        tile_rows = _round_up(tile_rows // 2, sub)  # give both TCs work (v7x)

    # ---- VMEM budgeting: shrink rows, else switch to the K-tiled path -------
    def need_fullk(tr, tc):
        n = (2 * tr * D_pad * x_it          # x row blocks (double-buffered)
             + 2 * D_pad * tc * mm_it       # W tiles
             + 2 * tc * 4                   # bias row
             + 2 * tr * tc * out_it)        # out tiles
        if tc < D_pad:
            n += 2 * tr * tc * x_it         # column-tiled residual input
        if cast:
            n += tr * D_pad * mm_it         # bf16 cast scratch
        return n

    def need_ktiled(tr, tc, tk):
        return (2 * tr * tk * mm_it + 2 * tk * tc * mm_it + 2 * tc * 4
                + 2 * tr * tc * x_it + 2 * tr * tc * out_it + tr * tc * 4)

    tile_rows0 = tile_rows
    use_k = tile_k is not None
    if not use_k:
        while need_fullk(tile_rows, tile_cols) > vmem_cap and tile_rows > 128:
            tile_rows = _round_up(max(tile_rows // 2, 128), sub)
        if need_fullk(tile_rows, tile_cols) > vmem_cap:
            use_k = True        # K-tile instead of shrinking rows further
    if use_k:
        tile_rows = tile_rows0
        if tile_k is None or tile_k % 128 != 0 or D_pad % tile_k != 0:
            tile_k = next(c for c in (512, 256, 128) if D_pad % c == 0)
        if tile_cols > 512 or D_pad % tile_cols != 0:
            tile_cols = next(c for c in (256, 128) if D_pad % c == 0)
        while (need_ktiled(tile_rows, tile_cols, tile_k) > vmem_cap
               and tile_rows > sub):
            tile_rows = _round_up(max(tile_rows // 2, sub), sub)

    N_pad = _round_up(N, tile_rows)
    gi = N_pad // tile_rows
    gj = D_pad // tile_cols

    # ---- pad to tile-aligned shapes (zero padding is inert, sliced off) -----
    xp = x if (N_pad, D_pad) == (N, D) else jnp.pad(
        x, ((0, N_pad - N), (0, D_pad - D)))
    wp = w if D_pad == D else jnp.pad(w, ((0, D_pad - D), (0, D_pad - D)))
    bp = b if D_pad == D else jnp.pad(b, (0, D_pad - D))
    w_mm = wp.astype(matmul_dtype)
    b_row = bp.reshape(1, D_pad).astype(jnp.float32)

    if use_k:
        gk = D_pad // tile_k
        grid = (gi, gj, gk)
        kernel = _residual_ktiled_kernel
        x_mm = xp.astype(matmul_dtype) if cast else xp
        in_specs = [
            pl.BlockSpec((tile_rows, tile_k), lambda i, j, k: (i, k)),
            pl.BlockSpec((tile_k, tile_cols), lambda i, j, k: (k, j)),
            pl.BlockSpec((1, tile_cols), lambda i, j, k: (0, j)),
            pl.BlockSpec((tile_rows, tile_cols), lambda i, j, k: (i, j)),
        ]
        out_spec = pl.BlockSpec((tile_rows, tile_cols), lambda i, j, k: (i, j))
        scratch = [pltpu.VMEM((tile_rows, tile_cols), jnp.float32)]
        dims = ("parallel", "parallel", "arbitrary")
        args = (x_mm, w_mm, b_row, xp)
        need = need_ktiled(tile_rows, tile_cols, tile_k)
    else:
        grid = (gi, gj)
        has_res_input = gj > 1
        kernel = functools.partial(_residual_fullk_kernel,
                                   has_res_input=has_res_input, cast=cast)
        in_specs = [
            # x full-K row block, resident across the column sweep.
            pl.BlockSpec((tile_rows, D_pad), lambda i, j: (i, 0)),
            # W: one output-column tile (never changes when gj == 1).
            pl.BlockSpec((D_pad, tile_cols), lambda i, j: (0, j)),
            # bias tile for this column block.
            pl.BlockSpec((1, tile_cols), lambda i, j: (0, j)),
        ]
        args = [xp, w_mm, b_row]
        if has_res_input:
            in_specs.append(
                pl.BlockSpec((tile_rows, tile_cols), lambda i, j: (i, j)))
            args.append(xp)
        out_spec = pl.BlockSpec((tile_rows, tile_cols), lambda i, j: (i, j))
        scratch = ([pltpu.VMEM((tile_rows, D_pad), matmul_dtype)]
                   if cast else [])
        # Cast scratch is carried across the j sweep -> j must run in order on
        # one core; otherwise both axes are megacore-parallel.
        dims = ("parallel", "arbitrary" if cast else "parallel")
        args = tuple(args)
        need = need_fullk(tile_rows, tile_cols)

    vmem_limit = int(min(vmem_cap, max(32 * 1024 * 1024, need + need // 4)))

    out = pl.pallas_call(
        kernel,
        out_shape=jax.ShapeDtypeStruct((N_pad, D_pad), out_dtype),
        grid_spec=pltpu.PrefetchScalarGridSpec(
            num_scalar_prefetch=0,
            grid=grid,
            in_specs=in_specs,
            out_specs=out_spec,
            scratch_shapes=tuple(scratch)),
        compiler_params=pltpu.CompilerParams(
            dimension_semantics=dims,
            vmem_limit_bytes=vmem_limit),
    )(*args)

    if (N_pad, D_pad) != (N, D):
        out = out[:N, :D]
    return out


def residual_forward(x_bsd, w, b, **kwargs):
    """Residual(Linear).forward for x of shape (B, S, D)."""
    B, S, D = x_bsd.shape
    out2 = residual_linear(x_bsd.reshape(B * S, D), w, b, **kwargs)
    return out2.reshape(B, S, D)


if __name__ == "__main__":
    key = jax.random.PRNGKey(0)
    kx, kw, kb, kx2, kw2, kb2 = jax.random.split(key, 6)

    # ---- check 1: module-scale small shape, exact f32 path ------------------
    # D padded 32 -> 128, full-W resident, residual from the resident row
    # block (x streamed once), grid (2, 1) so both v7x TensorCores get work.
    B, S, D = 2, 8, 32
    x = jax.random.normal(kx, (B, S, D), dtype=jnp.float32)
    bound = 1.0 / (D ** 0.5)
    w = jax.random.uniform(kw, (D, D), minval=-bound, maxval=bound,
                           dtype=jnp.float32)
    b = jax.random.uniform(kb, (D,), minval=-bound, maxval=bound,
                           dtype=jnp.float32)
    out = jax.block_until_ready(residual_forward(x, w, b))
    ref = (jnp.einsum("bsd,de->bse", x, w) + b) + x
    assert out.shape == (B, S, D)
    assert jnp.allclose(out, ref, atol=1e-5, rtol=1e-5)

    # ---- check 2: larger shape, exercise every code path --------------------
    B2, S2, D2 = 2, 256, 384          # N = 512 rows, D_pad = 384
    x2 = jax.random.normal(kx2, (B2, S2, D2), dtype=jnp.float32)
    bound2 = 1.0 / (D2 ** 0.5)
    w2 = jax.random.uniform(kw2, (D2, D2), minval=-bound2, maxval=bound2,
                            dtype=jnp.float32)
    b2 = jax.random.uniform(kb2, (D2,), minval=-bound2, maxval=bound2,
                            dtype=jnp.float32)
    ref2 = (jnp.einsum("bsd,de->bse", x2, w2) + b2) + x2

    # (a) default exact f32 path: full-W residency, x streamed once, grid (2,1).
    out_a = jax.block_until_ready(residual_forward(x2, w2, b2))
    assert jnp.allclose(out_a, ref2, atol=1e-4, rtol=1e-4)

    # (b) forced column tiling (gj = 3): the large-D layout with a
    #     column-tiled residual input.
    out_b = jax.block_until_ready(residual_forward(x2, w2, b2, tile_cols=128))
    assert jnp.allclose(out_b, ref2, atol=1e-4, rtol=1e-4)

    # (c) K-tiled accumulator path (forced small tile_k to exercise it).
    out_c = jax.block_until_ready(residual_forward(x2, w2, b2, tile_k=128))
    assert jnp.allclose(out_c, ref2, atol=1e-4, rtol=1e-4)

    # (d) bf16 MXU fast path: bf16 operands (cast once per row tile in VMEM),
    #     f32 accumulation + exact f32 residual.
    out_d = jax.block_until_ready(
        residual_forward(x2, w2, b2, matmul_dtype=jnp.bfloat16))
    ref2_bf16 = (jnp.einsum("bsd,de->bse",
                            x2.astype(jnp.bfloat16), w2.astype(jnp.bfloat16),
                            preferred_element_type=jnp.float32) + b2) + x2
    assert jnp.allclose(out_d, ref2_bf16, atol=1e-2, rtol=1e-2)

    print("KERNEL_OK")
</pallas_src>

<mosaic_0001>
module attributes {stable_mosaic.version = 11 : i64} {
  func.func @_residual_fullk_kernel(%arg0: i32, %arg1: i32, %arg2: memref<8x128xf32, #tpu.memory_space<vmem>>, %arg3: memref<128x128xf32, #tpu.memory_space<vmem>>, %arg4: memref<1x128xf32, #tpu.memory_space<vmem>>, %arg5: memref<8x128xf32, #tpu.memory_space<vmem>>) attributes {dimension_semantics = [#tpu.dimension_semantics<parallel>, #tpu.dimension_semantics<parallel>], iteration_bounds = array<i64: 2, 1>, scalar_prefetch = 0 : i64, scratch_operands = 0 : i64, tpu.core_type = #tpu.core_type<tc>, window_params = [{transform_indices = @transform_0, window_bounds = array<i64: 8, 128>}, {transform_indices = @transform_1, window_bounds = array<i64: 128, 128>}, {transform_indices = @transform_2, window_bounds = array<i64: 1, 128>}, {transform_indices = @transform_3, window_bounds = array<i64: 8, 128>}]} {
    %c0 = arith.constant 0 : index
    %c0_0 = arith.constant 0 : index
    %0 = vector.load %arg2[%c0, %c0_0] : memref<8x128xf32, #tpu.memory_space<vmem>>, vector<8x128xf32>
    %c0_1 = arith.constant 0 : index
    %c0_2 = arith.constant 0 : index
    %1 = vector.load %arg3[%c0_1, %c0_2] : memref<128x128xf32, #tpu.memory_space<vmem>>, vector<128x128xf32>
    %cst = arith.constant dense<0.000000e+00> : vector<8x128xf32>
    %2 = tpu.matmul %0, %1, %cst {dimension_numbers = #tpu.dot_dimension_numbers<[1], [0], [0], [1], [0, 0, 1, 1], [], []>} : vector<8x128xf32>, vector<128x128xf32>, vector<8x128xf32> -> vector<8x128xf32>
    %c0_3 = arith.constant 0 : index
    %c0_4 = arith.constant 0 : index
    %3 = vector.load %arg4[%c0_3, %c0_4] : memref<1x128xf32, #tpu.memory_space<vmem>>, vector<1x128xf32>
    %4 = vector.broadcast %3 : vector<1x128xf32> to vector<8x128xf32>
    %5 = arith.addf %2, %4 : vector<8x128xf32>
    %c0_5 = arith.constant 0 : index
    %c0_6 = arith.constant 0 : index
    %6 = vector.load %arg2[%c0_5, %c0_6] : memref<8x128xf32, #tpu.memory_space<vmem>>, vector<8x128xf32>
    %7 = arith.addf %5, %6 : vector<8x128xf32>
    %c0_7 = arith.constant 0 : index
    %c0_8 = arith.constant 0 : index
    %8 = vector.load %arg5[%c0_7, %c0_8] : memref<8x128xf32, #tpu.memory_space<vmem>>, vector<8x128xf32>
    tpu.vector_store %arg5[%c0_7, %c0_8], %7 {strides = array<i32>} : memref<8x128xf32, #tpu.memory_space<vmem>>, vector<8x128xf32>,
    return
  }
  func.func @transform_0(%arg0: i32, %arg1: i32) -> (i32, i32) {
    %c0_i32 = arith.constant 0 : i32
    %c0_i32_0 = arith.constant 0 : i32
    return %arg0, %c0_i32 : i32, i32
  }
  func.func @transform_1(%arg0: i32, %arg1: i32) -> (i32, i32) {
    %c0_i32 = arith.constant 0 : i32
    %c0_i32_0 = arith.constant 0 : i32
    return %c0_i32, %arg1 : i32, i32
  }
  func.func @transform_2(%arg0: i32, %arg1: i32) -> (i32, i32) {
    %c0_i32 = arith.constant 0 : i32
    %c0_i32_0 = arith.constant 0 : i32
    return %c0_i32, %arg1 : i32, i32
  }
  func.func @transform_3(%arg0: i32, %arg1: i32) -> (i32, i32) {
    %c0_i32 = arith.constant 0 : i32
    return %arg0, %arg1 : i32, i32
  }
}

</mosaic_0001>

<llo_original>
// kernel: tpu_custom_call.1
$region0: #{tpu_custom_call.1}
  #allocation0 [shape = 'u32[]', space=smem, size = 0x4, offset = 0x4, fixed_abs, tag = 'smem constant byte address 0x4 - core index']
  #allocation1 [shape = 'u32[144,128]{1,0:T(1,128)}', space=vmem, size = 0x12000, scoped, tag = 'internal scratch']
  %s0 = inlined_call_operand.hbm [shape: f32[16,128], index: 0, kind: input, shape index: {}]
  %s1 = inlined_call_operand.hbm [shape: f32[128,128], index: 1, kind: input, shape index: {}]
  %s2 = inlined_call_operand.vmem [shape: f32[1,128], index: 2, kind: input, shape index: {}]
  %s3 = inlined_call_operand.hbm [shape: f32[16,128], index: 3, kind: output, shape index: {}]
  %s4 = sld [smem:[#allocation0]]
  $region53: #{tpu_custom_call.1} parent=0
    _
  %s6 = ssub.s32 1, %s4
  %s7 = scalar_select 0, %s6, %s4
  $region1: #{tpu_custom_call.1} parent=0
    #allocation2 [shape = 'u8[8192]{0}', space=vmem, size = 0x2000, scoped, tag = 'input window, operand 0']
    #allocation3 [shape = 's32[2]{0}', space=sflag, size = 0x8, scoped, tag = 'scoped memory for tpu_custom_call.1']
    #allocation4 [shape = 's32[2]{0}', space=sflag, size = 0x8, scoped, tag = 'scoped memory for tpu_custom_call.1']
    #allocation5 [shape = 'u8[65536]{0}', space=vmem, size = 0x10000, scoped, tag = 'input window, operand 1, single buffered']
    #allocation6 [shape = 's32[1]{0}', space=sflag, size = 0x4, scoped, tag = 'scoped memory for tpu_custom_call.1']
    #allocation7 [shape = 'u8[8192]{0}', space=vmem, size = 0x2000, scoped, tag = 'output window, operand 0']
    %8 = vsyncpa [#allocation3], 0
    %s9 = scalar_lea.sflag [#allocation3], 1
    %10 = vsyncpa %s9, 0
    %11 = vsyncpa [#allocation6], 0
    %12 = vsyncpa [#allocation4], 0
    %s13 = scalar_lea.sflag [#allocation4], 1
    %14 = vsyncpa %s13, 0
    loop: start=0, step=1, limit=4
    $region2: #{tpu_custom_call.1} parent=1 // loop_pre_header
      _
    $region3: #{tpu_custom_call.1} parent=1 // loop_header
      %s16 = sphi 0, %s20
      %p17 = scmp.ge.s32.totalorder %s16, 4
      %s23 = sphi 0, %s35
      %s24 = sphi 0, %s31
      %s25 = sphi 0, %s23
      %s26 = sphi 0, %s24
      %s27 = sphi 0, %s25
      %s28 = sphi 0, %s26
      %s38 = sphi 0, %s40
      %s41 = sphi 0, %s38
      %s42 = sphi 0, %s41
      %s58 = sphi 0, %s42
      %s64 = sphi 0, %s66
      %s67 = sphi 0, %s64
      %s68 = sphi 0, %s67
      %s84 = sphi 0, %s68
      %s90 = sphi 0, %s92
      %s93 = sphi 0, %s90
      %s94 = sphi 0, %s93
      %s110 = sphi 0, %s94
      %s118 = sphi 0, %s120
      %s121 = sphi 0, %s118
      %s122 = sphi 0, %s121
      %s138 = sphi 0, %s122
    $region4: #{tpu_custom_call.1} parent=1 // loop_header_branch
      %19 = sbr.rel (%p17) target = $region8
    $region5: #{tpu_custom_call.1} parent=1 // loop_body
      %s21 = ssub.s32 %s16, 1
      %s22 = ssub.s32 %s16, 2
      %s29 = sadd.s32 1, %s24
      %p30 = scmp.ge.s32.totalorder %s29, 1
      %s31 = scalar_select %p30, 0, %s29
      %s32 = sadd.s32 1, %s23
      %s33 = scalar_select %p30, %s32, %s23
      %p34 = scmp.ge.s32.totalorder %s33, 2
      %s35 = scalar_select %p34, 0, %s33
      %s36 = ssub.s32 %s23, %s35
      %p37 = scmp.eq.s32.totalorder %s36, 0
      %s39 = sadd.s32 %s38, 1
      %s40 = scalar_select %p37, %s38, %s39
      %p43 = pneg %p37
      %p44 = scmp.eq.s32.totalorder %s16, 1
      %p45 = por %p43, %p44
      %p46 = scmp.ne.s32.totalorder %s38, %s41
      %p47 = scmp.eq.s32.totalorder %s16, 0
      %p48 = por %p46, %p47
      %p49 = scmp.ne.s32.totalorder %s38, %s41
      %p50 = scmp.eq.s32.totalorder %s21, 1
      %p51 = por %p49, %p50
      %p52 = scmp.ne.s32.totalorder %s41, %s42
      %p53 = scmp.eq.s32.totalorder %s21, 0
      %p54 = por %p52, %p53
      %p55 = scmp.ne.s32.totalorder %s41, %s42
      %p56 = scmp.eq.s32.totalorder %s22, 1
      %p57 = por %p55, %p56
      %p59 = scmp.ne.s32.totalorder %s42, %s58
      %p60 = scmp.eq.s32.totalorder %s22, 0
      %p61 = por %p59, %p60
      %s62 = ssub.s32 %s24, %s31
      %p63 = scmp.eq.s32.totalorder %s62, 0
      %s65 = sadd.s32 %s64, 1
      %s66 = scalar_select %p63, %s64, %s65
      %p69 = pneg %p63
      %p70 = scmp.eq.s32.totalorder %s16, 1
      %p71 = por %p69, %p70
      %p72 = scmp.ne.s32.totalorder %s64, %s67
      %p73 = scmp.eq.s32.totalorder %s16, 0
      %p74 = por %p72, %p73
      %p75 = scmp.ne.s32.totalorder %s64, %s67
      %p76 = scmp.eq.s32.totalorder %s21, 1
      %p77 = por %p75, %p76
      %p78 = scmp.ne.s32.totalorder %s67, %s68
      %p79 = scmp.eq.s32.totalorder %s21, 0
      %p80 = por %p78, %p79
      %p81 = scmp.ne.s32.totalorder %s67, %s68
      %p82 = scmp.eq.s32.totalorder %s22, 1
      %p83 = por %p81, %p82
      %p85 = scmp.ne.s32.totalorder %s68, %s84
      %p86 = scmp.eq.s32.totalorder %s22, 0
      %p87 = por %p85, %p86
      %s88 = ssub.s32 %s24, %s31
      %p89 = scmp.eq.s32.totalorder %s88, 0
      %s91 = sadd.s32 %s90, 1
      %s92 = scalar_select %p89, %s90, %s91
      %p95 = pneg %p89
      %p96 = scmp.eq.s32.totalorder %s16, 1
      %p97 = por %p95, %p96
      %p98 = scmp.ne.s32.totalorder %s90, %s93
      %p99 = scmp.eq.s32.totalorder %s16, 0
      %p100 = por %p98, %p99
      %p101 = scmp.ne.s32.totalorder %s90, %s93
      %p102 = scmp.eq.s32.totalorder %s21, 1
      %p103 = por %p101, %p102
      %p104 = scmp.ne.s32.totalorder %s93, %s94
      %p105 = scmp.eq.s32.totalorder %s21, 0
      %p106 = por %p104, %p105
      %p107 = scmp.ne.s32.totalorder %s93, %s94
      %p108 = scmp.eq.s32.totalorder %s22, 1
      %p109 = por %p107, %p108
      %p111 = scmp.ne.s32.totalorder %s94, %s110
      %p112 = scmp.eq.s32.totalorder %s22, 0
      %p113 = por %p111, %p112
      %s114 = ssub.s32 %s23, %s35
      %s115 = ssub.s32 %s24, %s31
      %s116 = sor.u32 %s114, %s115
      %p117 = scmp.eq.s32.totalorder %s116, 0
      %s119 = sadd.s32 %s118, 1
      %s120 = scalar_select %p117, %s118, %s119
      %p123 = pneg %p117
      %p124 = scmp.eq.s32.totalorder %s16, 1
      %p125 = por %p123, %p124
      %p126 = scmp.ne.s32.totalorder %s118, %s121
      %p127 = scmp.eq.s32.totalorder %s16, 0
      %p128 = por %p126, %p127
      %p129 = scmp.ne.s32.totalorder %s118, %s121
      %p130 = scmp.eq.s32.totalorder %s21, 1
      %p131 = por %p129, %p130
      %p132 = scmp.ne.s32.totalorder %s121, %s122
      %p133 = scmp.eq.s32.totalorder %s21, 0
      %p134 = por %p132, %p133
      %p135 = scmp.ne.s32.totalorder %s121, %s122
      %p136 = scmp.eq.s32.totalorder %s22, 1
      %p137 = por %p135, %p136
      %p139 = scmp.ne.s32.totalorder %s122, %s138
      %p140 = scmp.eq.s32.totalorder %s22, 0
      %p141 = por %p139, %p140
      %p142 = scmp.le.s32.totalorder 1, %s16
      %p143 = scmp.lt.s32.totalorder %s16, 3
      %p144 = pnand %p142, %p143
      %p145 = pneg %p144
      // Predicated region
      $region9: #{tpu_custom_call.1} parent=5 // pred_check
        _
      $region10: #{tpu_custom_call.1} parent=5 // pred_check_branch
        %147 = sbr.rel (%p144) target = $region12
      $region11: #{tpu_custom_call.1} parent=5 // pred_region
        %s148 = ssub.s32 %s16, 1
        // Predicated region
        $region13: #{tpu_custom_call.1} parent=11 // pred_check
          %p149 = pneg %p80
        $region14: #{tpu_custom_call.1} parent=11 // pred_check_branch
          %151 = sbr.rel (%p149) target = $region16
        $region15: #{tpu_custom_call.1} parent=11 // pred_region
          %s153 = ssub.s32 2048, 2048
          %154 = vsyncadd [#allocation6], %s153
          %s155 = smul.addr %s26, 128
          %s156 = scalar_lea.hbm %s1, %s155
          %s157 = sshll.u32 [#allocation5], 4
          %s158 = int_to_ptr.vmem [resolvable:$true] %s157
          %163 = dma.hbm_to_vmem [thread:$0]  %s156, 2048, %s158, [#allocation6], 128, 128, 8
        $region16: #{tpu_custom_call.1} parent=11 // pred_fallthru
          _
        // Predicated region
        $region17: #{tpu_custom_call.1} parent=11 // pred_check
          %p164 = pneg %p106
        $region18: #{tpu_custom_call.1} parent=11 // pred_check_branch
          %166 = sbr.rel (%p164) target = $region20
        $region19: #{tpu_custom_call.1} parent=11 // pred_region
          %p167 = scmp.lt.s32.totalorder %s26, 0
          %s168 = scalar_select %p167, %s26, 0
          %s169 = scalar_lea.vmem %s2, %s168
        $region20: #{tpu_custom_call.1} parent=11 // pred_fallthru
          _
      $region12: #{tpu_custom_call.1} parent=5 // pred_fallthru
        _
      %p170 = scmp.lt.s32.totalorder %s16, 2
      // Predicated region
      $region21: #{tpu_custom_call.1} parent=5 // pred_check
        %p171 = pneg %p170
      $region22: #{tpu_custom_call.1} parent=5 // pred_check_branch
        %173 = sbr.rel (%p171) target = $region24
      $region23: #{tpu_custom_call.1} parent=5 // pred_region
        // Predicated region
        $region25: #{tpu_custom_call.1} parent=23 // pred_check
          %p174 = pneg %p48
        $region26: #{tpu_custom_call.1} parent=23 // pred_check_branch
          %176 = sbr.rel (%p174) target = $region28
        $region27: #{tpu_custom_call.1} parent=23 // pred_region
          %s177 = sand.u32 %s38, 1
          %s178 = scalar_lea.sflag [#allocation3], %s177
          %s179 = sand.u32 %s38, 1
          %s180 = smul.addr %s179, 8
          %s181 = scalar_lea.vmem [#allocation2], %s180
          %s183 = ssub.s32 128, 128
          %184 = vsyncadd %s178, %s183
          %s185 = smul.addr %s23, 128
          %s186 = scalar_lea.hbm %s0, %s185
          %s188 = sshll.u32 %s181, 4
          %s189 = int_to_ptr.vmem [resolvable:$true] %s188
          %191 = dma.hbm_to_vmem [thread:$0]  %s186, 128, %s189, %s178
        $region28: #{tpu_custom_call.1} parent=23 // pred_fallthru
          _
      $region24: #{tpu_custom_call.1} parent=5 // pred_fallthru
        _
      %p192 = scmp.le.s32.totalorder 1, %s16
      %p193 = scmp.lt.s32.totalorder %s16, 3
      %p194 = pnand %p192, %p193
      %p195 = pneg %p194
      // Predicated region
      $region29: #{tpu_custom_call.1} parent=5 // pred_check
        _
      $region30: #{tpu_custom_call.1} parent=5 // pred_check_branch
        %197 = sbr.rel (%p194) target = $region32
      $region31: #{tpu_custom_call.1} parent=5 // pred_region
        %s198 = ssub.s32 %s16, 1
        %s199 = sand.u32 %s41, 1
        %s200 = scalar_lea.sflag [#allocation3], %s199
        %s201 = sand.u32 %s41, 1
        %s202 = smul.addr %s201, 8
        %s203 = scalar_lea.vmem [#allocation2], %s202
        // Predicated region
        $region33: #{tpu_custom_call.1} parent=31 // pred_check
          %p204 = pneg %p54
        $region34: #{tpu_custom_call.1} parent=31 // pred_check_branch
          %206 = sbr.rel (%p204) target = $region36
        $region35: #{tpu_custom_call.1} parent=31 // pred_region
          %207 = dma.done %s200, 128
        $region36: #{tpu_custom_call.1} parent=31 // pred_fallthru
          _
        // Predicated region
        $region37: #{tpu_custom_call.1} parent=31 // pred_check
          %p208 = pneg %p80
        $region38: #{tpu_custom_call.1} parent=31 // pred_check_branch
          %210 = sbr.rel (%p208) target = $region40
        $region39: #{tpu_custom_call.1} parent=31 // pred_region
          %211 = dma.done [#allocation6], 2048
        $region40: #{tpu_custom_call.1} parent=31 // pred_fallthru
          _
        %s212 = sand.u32 %s41, 1
        %s213 = scalar_lea.sflag [#allocation3], %s212
        %s214 = sand.u32 %s41, 1
        %s215 = smul.addr %s214, 8
        %s216 = scalar_lea.vmem [#allocation2], %s215
        %p217 = pneg %p54
        %p218 = pneg %p51
        %p219 = pneg %p80
        %p220 = pneg %p77
        %p221 = scmp.lt.s32.totalorder %s26, 0
        %s222 = scalar_select %p221, %s26, 0
        %s223 = scalar_lea.vmem %s2, %s222
        %p224 = pneg %p106
        %p225 = pneg %p103
        %p226 = pneg %p134
        %p227 = pneg %p131
        %s228 = sand.u32 %s121, 1
        %s229 = scalar_lea.sflag [#allocation4], %s228
        %s230 = sand.u32 %s121, 1
        %s231 = smul.addr %s230, 8
        %s232 = scalar_lea.vmem [#allocation7], %s231
        %p233 = scmp.lt.s32.totalorder %s26, 0
        %s234 = scalar_select %p233, %s26, 0
        %s235 = scalar_lea.vmem %s2, %s234
        %v236 = vld [vmem:[%s203] sm:$0xff]
        %v237 = vld [vmem:[#allocation5] sm:$0xff]
        %v238 = vld [vmem:[#allocation5 + $0x8] sm:$0xff]
        %v239 = vld [vmem:[#allocation5 + $0x10] sm:$0xff]
        %v240 = vld [vmem:[#allocation5 + $0x18] sm:$0xff]
        %v241 = vld [vmem:[#allocation5 + $0x20] sm:$0xff]
        %v242 = vld [vmem:[#allocation5 + $0x28] sm:$0xff]
        %v243 = vld [vmem:[#allocation5 + $0x30] sm:$0xff]
        %v244 = vld [vmem:[#allocation5 + $0x38] sm:$0xff]
        %v245 = vld [vmem:[#allocation5 + $0x40] sm:$0xff]
        %v246 = vld [vmem:[#allocation5 + $0x48] sm:$0xff]
        %v247 = vld [vmem:[#allocation5 + $0x50] sm:$0xff]
        %v248 = vld [vmem:[#allocation5 + $0x58] sm:$0xff]
        %v249 = vld [vmem:[#allocation5 + $0x60] sm:$0xff]
        %v250 = vld [vmem:[#allocation5 + $0x68] sm:$0xff]
        %v251 = vld [vmem:[#allocation5 + $0x70] sm:$0xff]
        %v252 = vld [vmem:[#allocation5 + $0x78] sm:$0xff]
        %v253 = vld [vmem:[%s235] sm:$0x1]
        %v255 = vlaneseq
        %v256 = vshrl.u32 %v255, 7
        %v257 = vsub.s32 0, %v256
        %v258 = vrot.slane %v253, %v257
        %260 = vmatprep.subr.mxu0 0.0
        %261 = vmatpush1.msra.mxu0 %v252
        %262 = vmatprep.subr.mxu0 0.0
        %263 = vmatpush1.msra.mxu0 %v251
        %264 = vmatprep.subr.mxu0 0.0
        %265 = vmatpush1.msra.mxu0 %v250
        %266 = vmatprep.subr.mxu0 0.0
        %267 = vmatpush1.msra.mxu0 %v249
        %268 = vmatprep.subr.mxu0 0.0
        %269 = vmatpush1.msra.mxu0 %v248
        %270 = vmatprep.subr.mxu0 0.0
        %271 = vmatpush1.msra.mxu0 %v247
        %272 = vmatprep.subr.mxu0 0.0
        %273 = vmatpush1.msra.mxu0 %v246
        %274 = vmatprep.subr.mxu0 0.0
        %275 = vmatpush1.msra.mxu0 %v245
        %276 = vmatprep.subr.mxu0 0.0
        %277 = vmatpush1.msra.mxu0 %v244
        %278 = vmatprep.subr.mxu0 0.0
        %279 = vmatpush1.msra.mxu0 %v243
        %280 = vmatprep.subr.mxu0 0.0
        %281 = vmatpush1.msra.mxu0 %v242
        %282 = vmatprep.subr.mxu0 0.0
        %283 = vmatpush1.msra.mxu0 %v241
        %284 = vmatprep.subr.mxu0 0.0
        %285 = vmatpush1.msra.mxu0 %v240
        %286 = vmatprep.subr.mxu0 0.0
        %287 = vmatpush1.msra.mxu0 %v239
        %288 = vmatprep.subr.mxu0 0.0
        %289 = vmatpush1.msra.mxu0 %v238
        %290 = vmatprep.subr.mxu0 0.0
        %291 = vmatpush1.msra.mxu0 %v237
        %292 = vmatprep.subr.mxu0 0.0
        %293 = vmatpush2.msra.mxu0 0.0
        %294 = vmatprep.subr.mxu0 0.0
        %295 = vmatpush2.msra.mxu0 0.0
        %296 = vmatprep.subr.mxu0 0.0
        %297 = vmatpush2.msra.mxu0 0.0
        %298 = vmatprep.subr.mxu0 0.0
        %299 = vmatpush2.msra.mxu0 0.0
        %300 = vmatprep.subr.mxu0 0.0
        %301 = vmatpush2.msra.mxu0 0.0
        %302 = vmatprep.subr.mxu0 0.0
        %303 = vmatpush2.msra.mxu0 0.0
        %304 = vmatprep.subr.mxu0 0.0
        %305 = vmatpush2.msra.mxu0 0.0
        %306 = vmatprep.subr.mxu0 0.0
        %307 = vmatpush2.msra.mxu0 0.0
        %308 = vmatprep.subr.mxu0 0.0
        %309 = vmatpush2.msra.mxu0 0.0
        %310 = vmatprep.subr.mxu0 0.0
        %311 = vmatpush2.msra.mxu0 0.0
        %312 = vmatprep.subr.mxu0 0.0
        %313 = vmatpush2.msra.mxu0 0.0
        %314 = vmatprep.subr.mxu0 0.0
        %315 = vmatpush2.msra.mxu0 0.0
        %316 = vmatprep.subr.mxu0 0.0
        %317 = vmatpush2.msra.mxu0 0.0
        %318 = vmatprep.subr.mxu0 0.0
        %319 = vmatpush2.msra.mxu0 0.0
        %320 = vmatprep.subr.mxu0 0.0
        %321 = vmatpush2.msra.mxu0 0.0
        %322 = vmatprep.subr.mxu0 0.0
        %323 = vmatpush2.msra.mxu0 0.0
        %324 = vmatprep.mubr.f32.mxu0 0.0
        %325 = vmatmul.mubr.f32.gmra.mxu0 %v236
        %v326 = vpop.f32.mrf.mxu0
        %v327 = vadd.f32 %v258, %v326
        %v328 = vpop.f32.mrf.mxu0
        %329 = vdwg.mxu0
        %v330 = vadd.f32 %v327, %v236
        %331 = vst [vmem:[%s232] sm:$0xff] %v330
        %s332 = sand.u32 %s121, 1
        %s333 = scalar_lea.sflag [#allocation4], %s332
        %s334 = sand.u32 %s121, 1
        %s335 = smul.addr %s334, 8
        %s336 = scalar_lea.vmem [#allocation7], %s335
        // Predicated region
        $region41: #{tpu_custom_call.1} parent=31 // pred_check
          %p337 = pneg %p131
        $region42: #{tpu_custom_call.1} parent=31 // pred_check_branch
          %339 = sbr.rel (%p337) target = $region44
        $region43: #{tpu_custom_call.1} parent=31 // pred_region
          %s341 = ssub.s32 128, 128
          %342 = vsyncadd %s333, %s341
          %s343 = sadd.s32 %s26, %s25
          %s344 = smul.addr %s343, 128
          %s345 = scalar_lea.hbm %s3, %s344
          %s347 = sshll.u32 %s336, 4
          %s348 = int_to_ptr.vmem [resolvable:$true] %s347
          %350 = dma.vmem_to_hbm [thread:$0]  %s348, 128, %s345, %s333
        $region44: #{tpu_custom_call.1} parent=31 // pred_fallthru
          _
      $region32: #{tpu_custom_call.1} parent=5 // pred_fallthru
        _
      %p351 = scmp.le.s32.totalorder 2, %s16
      // Predicated region
      $region45: #{tpu_custom_call.1} parent=5 // pred_check
        %p352 = pneg %p351
      $region46: #{tpu_custom_call.1} parent=5 // pred_check_branch
        %354 = sbr.rel (%p352) target = $region48
      $region47: #{tpu_custom_call.1} parent=5 // pred_region
        %s355 = ssub.s32 %s16, 2
        // Predicated region
        $region49: #{tpu_custom_call.1} parent=47 // pred_check
          %p356 = pneg %p137
        $region50: #{tpu_custom_call.1} parent=47 // pred_check_branch
          %358 = sbr.rel (%p356) target = $region52
        $region51: #{tpu_custom_call.1} parent=47 // pred_region
          %s359 = sand.u32 %s122, 1
          %s360 = scalar_lea.sflag [#allocation4], %s359
          %s361 = sand.u32 %s122, 1
          %s362 = smul.addr %s361, 8
          %s363 = scalar_lea.vmem [#allocation7], %s362
          %364 = dma.done %s360, 128
        $region52: #{tpu_custom_call.1} parent=47 // pred_fallthru
          _
      $region48: #{tpu_custom_call.1} parent=5 // pred_fallthru
        _
    $region6: #{tpu_custom_call.1} parent=1 // loop_footer
      %s20 = sadd.s32 1, %s16
    $region7: #{tpu_custom_call.1} parent=1 // loop_footer_branch
      %15 = sbr.rel target = $region3
    $region8: #{tpu_custom_call.1} parent=1 // loop_exit
      _
    %365 = vsyncpa [#allocation3], 1
    %s366 = scalar_lea.sflag [#allocation3], 1
    %367 = vsyncpa %s366, 1
    %368 = vsyncpa [#allocation6], 1
    %369 = vsyncpa [#allocation4], 1
    %s370 = scalar_lea.sflag [#allocation4], 1
    %371 = vsyncpa %s370, 1

</llo_original>
